<compile_context>
chip_gen: v7x
topology: tpu7x:2x2x1
jax: 0.10.0
libtpu: 0.0.40
codegen_flags: <defaults>
</compile_context>

<pallas_src>
import jax
import jax.numpy as jnp
from jax.experimental import pallas as pl
from jax.experimental.pallas import tpu as pltpu


def _loss_kernel(packed_ref, out_ref):
    # packed layout: [a1, a2, a3, loss_cox, loss_nll, loss_reg]
    a1 = packed_ref[0]
    a2 = packed_ref[1]
    a3 = packed_ref[2]
    loss_cox = packed_ref[3]
    loss_nll = packed_ref[4]
    loss_reg = packed_ref[5]

    loss_1 = (0.5 / a1) * loss_cox + jnp.log1p(a1)
    loss_2 = (0.5 / a2) * loss_nll + jnp.log1p(a2)
    loss_3 = (0.5 / a3) * loss_reg + jnp.log1p(a3)

    out_ref[0] = loss_1 + (loss_2 + loss_3)


def model_loss_layer_forward(a1, a2, a3, loss_cox, loss_nll, loss_reg):
    """All args are shape-(1,) float32 arrays. Returns shape-(1,) float32."""
    # Single packed SMEM operand: 1 DMA descriptor instead of 6.
    packed = jnp.concatenate(
        [a1, a2, a3, loss_cox, loss_nll, loss_reg]
    ).astype(jnp.float32)  # shape (6,); 1-D SMEM pads to 32 B internally.

    smem_spec = pl.BlockSpec(memory_space=pltpu.SMEM)
    return pl.pallas_call(
        _loss_kernel,
        out_shape=jax.ShapeDtypeStruct((1,), jnp.float32),
        in_specs=[smem_spec],
        out_specs=smem_spec,
    )(packed)


def init_params(key):
    """Deterministic stand-in for nn.init.uniform_(Parameter(Tensor(1)), 0.2, 1)."""
    k1, k2, k3 = jax.random.split(key, 3)
    a1 = jax.random.uniform(k1, (1,), jnp.float32, minval=0.2, maxval=1.0)
    a2 = jax.random.uniform(k2, (1,), jnp.float32, minval=0.2, maxval=1.0)
    a3 = jax.random.uniform(k3, (1,), jnp.float32, minval=0.2, maxval=1.0)
    return a1, a2, a3


if __name__ == "__main__":
    key = jax.random.PRNGKey(0)
    k_params, k_losses = jax.random.split(key)

    a1, a2, a3 = init_params(k_params)

    # Three scalar loss terms (e.g. cox / nll / regularization losses).
    kc, kn, kr = jax.random.split(k_losses, 3)
    loss_cox = jax.random.uniform(kc, (1,), jnp.float32, minval=0.0, maxval=2.0)
    loss_nll = jax.random.uniform(kn, (1,), jnp.float32, minval=0.0, maxval=2.0)
    loss_reg = jax.random.uniform(kr, (1,), jnp.float32, minval=0.0, maxval=2.0)

    out = model_loss_layer_forward(a1, a2, a3, loss_cox, loss_nll, loss_reg)
    out = jax.block_until_ready(out)

    # Pure-JAX reference check of the module's formula.
    ref = (
        loss_cox / (2.0 * a1) + jnp.log(1.0 + a1)
        + loss_nll / (2.0 * a2) + jnp.log(1.0 + a2)
        + loss_reg / (2.0 * a3) + jnp.log(1.0 + a3)
    )
    assert jnp.allclose(out, ref, rtol=1e-6, atol=1e-6), (out, ref)

    print("KERNEL_OK")
</pallas_src>

<mosaic_0001>
module attributes {stable_mosaic.version = 11 : i64} {
  func.func @_loss_kernel(%arg0: memref<6xf32, #tpu.memory_space<smem>>, %arg1: memref<1xf32, #tpu.memory_space<smem>>) attributes {dimension_semantics = [], scalar_prefetch = 0 : i64, scratch_operands = 0 : i64, tpu.core_type = #tpu.core_type<tc>} {
    %c0 = arith.constant 0 : index
    %0 = memref.load %arg0[%c0] : memref<6xf32, #tpu.memory_space<smem>>
    %c1 = arith.constant 1 : index
    %1 = memref.load %arg0[%c1] : memref<6xf32, #tpu.memory_space<smem>>
    %c2 = arith.constant 2 : index
    %2 = memref.load %arg0[%c2] : memref<6xf32, #tpu.memory_space<smem>>
    %c3 = arith.constant 3 : index
    %3 = memref.load %arg0[%c3] : memref<6xf32, #tpu.memory_space<smem>>
    %c4 = arith.constant 4 : index
    %4 = memref.load %arg0[%c4] : memref<6xf32, #tpu.memory_space<smem>>
    %c5 = arith.constant 5 : index
    %5 = memref.load %arg0[%c5] : memref<6xf32, #tpu.memory_space<smem>>
    %cst = arith.constant 5.000000e-01 : f32
    %6 = arith.divf %cst, %0 : f32
    %7 = arith.mulf %6, %3 : f32
    %8 = math.log1p %0 : f32
    %9 = arith.addf %7, %8 : f32
    %cst_0 = arith.constant 5.000000e-01 : f32
    %10 = arith.divf %cst_0, %1 : f32
    %11 = arith.mulf %10, %4 : f32
    %12 = math.log1p %1 : f32
    %13 = arith.addf %11, %12 : f32
    %cst_1 = arith.constant 5.000000e-01 : f32
    %14 = arith.divf %cst_1, %2 : f32
    %15 = arith.mulf %14, %5 : f32
    %16 = math.log1p %2 : f32
    %17 = arith.addf %15, %16 : f32
    %18 = arith.addf %13, %17 : f32
    %19 = arith.addf %9, %18 : f32
    %c0_2 = arith.constant 0 : index
    %20 = memref.load %arg1[%c0_2] : memref<1xf32, #tpu.memory_space<smem>>
    memref.store %19, %arg1[%c0_2] : memref<1xf32, #tpu.memory_space<smem>>
    return
  }
}

</mosaic_0001>

<llo_original>
// kernel: tpu_custom_call.1
$region0: #{tpu_custom_call.1}
  #allocation0 [shape = 'u32[]', space=smem, size = 0x4, offset = 0x4, fixed_abs, tag = 'smem constant byte address 0x4 - core index']
  #allocation1 [shape = 'u32[144,128]{1,0:T(1,128)}', space=vmem, size = 0x12000, scoped, tag = 'internal scratch']
  %s0 = inlined_call_operand.hbm [shape: f32[6], index: 0, kind: input, shape index: {}]
  %s1 = inlined_call_operand.hbm [shape: f32[1], index: 1, kind: output, shape index: {}]
  %s2 = sld [smem:[#allocation0]]
  $region18: #{tpu_custom_call.1} parent=0
    _
  %s4 = ssub.s32 1, %s2
  %s5 = scalar_select 0, %s4, %s2
  $region1: #{tpu_custom_call.1} parent=0
    #allocation2 [shape = 'u8[512]{0}', space=smem, size = 0x200, scoped, tag = 'input window, operand 0, single buffered']
    #allocation3 [shape = 's32[1]{0}', space=sflag, size = 0x4, scoped, tag = 'scoped memory for tpu_custom_call.1']
    #allocation4 [shape = 's32[1]{0}', space=sflag, size = 0x4, scoped, tag = 'scoped memory for tpu_custom_call.1']
    #allocation5 [shape = 'u8[512]{0}', space=smem, size = 0x200, scoped, tag = 'output window, operand 0, single buffered']
    %6 = vsyncpa [#allocation3], 0
    %7 = vsyncpa [#allocation4], 0
    // Predicated region
    $region2: #{tpu_custom_call.1} parent=1 // pred_check
      _
    $region3: #{tpu_custom_call.1} parent=1 // pred_check_branch
      %9 = sbr.rel (0) target = $region5
    $region4: #{tpu_custom_call.1} parent=1 // pred_region
      %s11 = ssub.s32 16, 16
      %12 = vsyncadd [#allocation3], %s11
      %15 = dma.hbm_to_smem %s0, 16, [#allocation2], [#allocation3]
    $region5: #{tpu_custom_call.1} parent=1 // pred_fallthru
      _
    // Predicated region
    $region6: #{tpu_custom_call.1} parent=1 // pred_check
      _
    $region7: #{tpu_custom_call.1} parent=1 // pred_check_branch
      %17 = sbr.rel (0) target = $region9
    $region8: #{tpu_custom_call.1} parent=1 // pred_region
      %18 = dma.done [#allocation3], 16
    $region9: #{tpu_custom_call.1} parent=1 // pred_fallthru
      _
    %19 = sfence
    %s20 = sld [smem:[#allocation2]]
    %s21 = sld [smem:[#allocation2 + $0x1]]
    %s22 = sld [smem:[#allocation2 + $0x2]]
    %s23 = sld [smem:[#allocation2 + $0x3]]
    %s24 = sld [smem:[#allocation2 + $0x4]]
    %s25 = sld [smem:[#allocation2 + $0x5]]
    %v26 = vstv %s20
    %v27 = vrcp.pop %v26
    %s28 = vtos %v27
    %s29 = smul.f32 0.5, %s28
    %s30 = smul.f32 %s29, %s23
    %v31 = vstv %s20
    %v32 = vadd.f32 %v31, 1.0
    %v33 = vlog2.pop %v32
    %v34 = vmul.f32 %v33, 0.6931472
    %v35 = vmul.f32 -0.5, %v31
    %v36 = vadd.f32 %v35, 1.0
    %v37 = vmul.f32 %v36, %v31
    %v38 = vand.u32 2147483647, %v31
    %vm39 = vcmp.lt.f32.partialorder %v38, 0.0004427343
    %v40 = vsel %vm39, %v37, %v34
    %s41 = vtos %v40
    %s42 = sadd.f32 %s30, %s41
    %v43 = vstv %s21
    %v44 = vrcp.pop %v43
    %s45 = vtos %v44
    %s46 = smul.f32 0.5, %s45
    %s47 = smul.f32 %s46, %s24
    %v48 = vstv %s21
    %v49 = vadd.f32 %v48, 1.0
    %v50 = vlog2.pop %v49
    %v51 = vmul.f32 %v50, 0.6931472
    %v52 = vmul.f32 -0.5, %v48
    %v53 = vadd.f32 %v52, 1.0
    %v54 = vmul.f32 %v53, %v48
    %v55 = vand.u32 2147483647, %v48
    %vm56 = vcmp.lt.f32.partialorder %v55, 0.0004427343
    %v57 = vsel %vm56, %v54, %v51
    %s58 = vtos %v57
    %s59 = sadd.f32 %s47, %s58
    %v60 = vstv %s22
    %v61 = vrcp.pop %v60
    %s62 = vtos %v61
    %s63 = smul.f32 0.5, %s62
    %s64 = smul.f32 %s63, %s25
    %v65 = vstv %s22
    %v66 = vadd.f32 %v65, 1.0
    %v67 = vlog2.pop %v66
    %v68 = vmul.f32 %v67, 0.6931472
    %v69 = vmul.f32 -0.5, %v65
    %v70 = vadd.f32 %v69, 1.0
    %v71 = vmul.f32 %v70, %v65
    %v72 = vand.u32 2147483647, %v65
    %vm73 = vcmp.lt.f32.partialorder %v72, 0.0004427343
    %v74 = vsel %vm73, %v71, %v68
    %s75 = vtos %v74
    %s76 = sadd.f32 %s64, %s75
    %s77 = sadd.f32 %s59, %s76
    %s78 = sadd.f32 %s42, %s77
    %s79 = scalar_lea.smem [#allocation5], 0
    %80 = sst [smem:[%s79]] %s78
    // Predicated region
    $region10: #{tpu_custom_call.1} parent=1 // pred_check
      _
    $region11: #{tpu_custom_call.1} parent=1 // pred_check_branch
      %82 = sbr.rel (0) target = $region13
    $region12: #{tpu_custom_call.1} parent=1 // pred_region
      %s84 = ssub.s32 16, 16
      %85 = vsyncadd [#allocation4], %s84
      %88 = dma.smem_to_hbm [#allocation5], 16, %s1, [#allocation4]
    $region13: #{tpu_custom_call.1} parent=1 // pred_fallthru
      _
    // Predicated region
    $region14: #{tpu_custom_call.1} parent=1 // pred_check
      _
    $region15: #{tpu_custom_call.1} parent=1 // pred_check_branch
      %90 = sbr.rel (0) target = $region17
    $region16: #{tpu_custom_call.1} parent=1 // pred_region
      %91 = dma.done [#allocation4], 16
    $region17: #{tpu_custom_call.1} parent=1 // pred_fallthru
      _
    %92 = sfence
    %93 = vsyncpa [#allocation3], 1
    %94 = vsyncpa [#allocation4], 1

</llo_original>
